<compile_context>
chip_gen: v7x
topology: tpu7x:2x2x1
jax: 0.10.0
libtpu: 0.0.40
codegen_flags: <defaults>
</compile_context>

<pallas_src>
import functools
import math

import jax
import jax.numpy as jnp
from jax import lax
from jax.experimental import pallas as pl
from jax.experimental.pallas import tpu as pltpu


def _round_up(x, m):
    return (x + m - 1) // m * m


def _cdiv(a, b):
    return (a + b - 1) // b


def _pick_tile(d, candidates=(512, 256, 128)):
    for t in candidates:
        if d % t == 0:
            return t
    return d


def _vmem_capacity_bytes():
    try:
        return int(pltpu.get_tpu_info().vmem_capacity_bytes)
    except Exception:
        return 64 << 20  # conservative fallback: v7x has 64 MiB per TensorCore


_SQRT_HALF = 0.7071067811865475


def _gelu_f32(x):
    # exact erf-based GELU (multiply instead of divide by sqrt(2))
    return 0.5 * x * (1.0 + lax.erf(x * _SQRT_HALF))


# ---------------------------------------------------------------------------
# Resident-weight path: full (dim_p, dim_p) weights stay in VMEM, 1-D grid over rows.
# ---------------------------------------------------------------------------
def ffn_kernel(x_ref, w1_ref, b1_ref, w2_ref, b2_ref, o_ref, *, n_chunks):
    w1 = w1_ref[...]                              # (dim_p, dim_p), (in, out) layout
    w2 = w2_ref[...]
    b1 = b1_ref[...].astype(jnp.float32)          # (1, dim_p)
    b2 = b2_ref[...].astype(jnp.float32)

    tm = x_ref.shape[0]
    chunk = tm // n_chunks
    # Static unroll over independent row sub-chunks: the MXU matmuls of chunk i can
    # co-issue with the EUP erf / VPU multiplies of chunk i-1 (different VLIW slots).
    for c in range(n_chunks):
        rows = pl.ds(c * chunk, chunk)            # static slice -> zero runtime cost
        x = x_ref[rows, :].astype(w1.dtype)
        h = jnp.dot(x, w1, preferred_element_type=jnp.float32) + b1
        h = _gelu_f32(h)
        y = jnp.dot(h.astype(w2.dtype), w2, preferred_element_type=jnp.float32) + b2
        # dropout: inference mode => identity
        o_ref[rows, :] = y.astype(o_ref.dtype)


# ---------------------------------------------------------------------------
# Fallback path for large dim: tiled matmul with K-reduction accumulator (P3 pattern).
# ---------------------------------------------------------------------------
def _linear_kernel(x_ref, w_ref, b_ref, o_ref, acc_ref, *, apply_gelu):
    k = pl.program_id(2)

    @pl.when(k == 0)
    def _():
        acc_ref[...] = jnp.zeros_like(acc_ref)

    acc_ref[...] += jnp.dot(x_ref[...].astype(w_ref.dtype), w_ref[...],
                            preferred_element_type=jnp.float32)

    @pl.when(k == pl.num_programs(2) - 1)
    def _():
        y = acc_ref[...] + b_ref[...].astype(jnp.float32)
        if apply_gelu:
            y = _gelu_f32(y)
        o_ref[...] = y.astype(o_ref.dtype)


def _tiled_linear(x2, wt, b2d, *, apply_gelu, out_dtype, tm, vmem_cap):
    n, K = x2.shape
    N = wt.shape[1]
    tn = _pick_tile(N)
    tk = _pick_tile(K)
    xbytes = x2.dtype.itemsize
    wbytes = wt.dtype.itemsize
    vmem_limit = min(
        vmem_cap,
        2 * tm * tk * xbytes + 2 * tk * tn * wbytes + 2 * tn * b2d.dtype.itemsize
        + 2 * tm * tn * jnp.dtype(out_dtype).itemsize + tm * tn * 4 + (8 << 20))
    return pl.pallas_call(
        functools.partial(_linear_kernel, apply_gelu=apply_gelu),
        out_shape=jax.ShapeDtypeStruct((n, N), out_dtype),
        grid_spec=pltpu.PrefetchScalarGridSpec(
            num_scalar_prefetch=0,
            grid=(_cdiv(n, tm), N // tn, K // tk),
            in_specs=[
                pl.BlockSpec((tm, tk), lambda i, j, k: (i, k)),
                pl.BlockSpec((tk, tn), lambda i, j, k: (k, j)),
                pl.BlockSpec((1, tn), lambda i, j, k: (0, j)),
            ],
            out_specs=pl.BlockSpec((tm, tn), lambda i, j, k: (i, j)),
            scratch_shapes=[pltpu.VMEM((tm, tn), jnp.float32)],
        ),
        compiler_params=pltpu.CompilerParams(
            dimension_semantics=("parallel", "parallel", "arbitrary"),
            vmem_limit_bytes=int(vmem_limit)),
    )(x2, wt, b2d)


# ---------------------------------------------------------------------------
# One-time parameter preparation (call at load time, reuse across forward calls).
# ---------------------------------------------------------------------------
def prepare_ffn_params(w1, b1, w2, b2, *, matmul_dtype=None):
    """Transpose PyTorch (out, in) weights to (in, out) so the kernel uses a plain
    row-major contraction (no per-step XLU transpose), zero-pad the feature dim to a
    lane-dense multiple of 128 (exact for this FFN), optionally cast to an MXU dtype."""
    dim = w1.shape[0]
    dim_p = dim if dim % 128 == 0 else _round_up(dim, 128)
    w1t = jnp.transpose(w1)
    w2t = jnp.transpose(w2)
    if dim_p != dim:
        pad2 = ((0, dim_p - dim), (0, dim_p - dim))
        w1t = jnp.pad(w1t, pad2)
        w2t = jnp.pad(w2t, pad2)
        b1 = jnp.pad(b1, (0, dim_p - dim))
        b2 = jnp.pad(b2, (0, dim_p - dim))
    if matmul_dtype is not None:
        w1t = w1t.astype(matmul_dtype)
        w2t = w2t.astype(matmul_dtype)
    return w1t, b1.reshape(1, dim_p), w2t, b2.reshape(1, dim_p), dim


def transformer_ffn(x, params, *, tm=512, vmem_limit_bytes=None):
    """x: (batch, seq, dim). params: output of prepare_ffn_params()."""
    w1t, b1, w2t, b2, dim = params
    dim_p = w1t.shape[0]
    batch, seq, xdim = x.shape
    assert xdim == dim
    n = batch * seq

    x2 = x.reshape(n, dim)
    if dim_p != dim:
        x2 = jnp.pad(x2, ((0, 0), (0, dim_p - dim)))  # zero feature padding is exact

    xbytes = x.dtype.itemsize
    wbytes = w1t.dtype.itemsize
    bbytes = b1.dtype.itemsize
    # dtype-aware sublane multiple: f32 -> 8, bf16 -> 16, int8/fp8 -> 32
    sub = max(8, 32 // xbytes)

    tm_eff = min(tm, _round_up(n, sub))
    # keep >= 2 grid steps so the "parallel" axis can feed both TensorCores (v7x)
    if _cdiv(n, tm_eff) < 2 and tm_eff > sub:
        tm_eff = max(sub, _round_up(_cdiv(tm_eff, 2), sub))

    vmem_cap = _vmem_capacity_bytes()
    headroom = 8 << 20

    def resident_budget(tm_):
        return (2 * dim_p * dim_p * wbytes          # W1 + W2, single-buffered
                + 2 * dim_p * bbytes                # biases, single-buffered
                + 2 * 2 * tm_ * dim_p * xbytes      # double-buffered x / out tiles
                + 3 * tm_ * dim_p * 4)              # in-kernel f32 intermediates (h, y)

    while tm_eff > sub and resident_budget(tm_eff) + headroom > vmem_cap:
        tm_eff = max(sub, _round_up(tm_eff // 2, sub))

    if resident_budget(tm_eff) + headroom > vmem_cap:
        # Weights too big to keep resident (e.g. dim >~2.5K f32 / ~3.5K bf16 on v7x):
        # two chained tiled-matmul calls with a VMEM f32 reduction accumulator.
        tm_fb = min(512, _round_up(n, sub))
        h = _tiled_linear(x2, w1t, b1, apply_gelu=True, out_dtype=x.dtype,
                          tm=tm_fb, vmem_cap=vmem_cap)
        out = _tiled_linear(h, w2t, b2, apply_gelu=False, out_dtype=x.dtype,
                            tm=tm_fb, vmem_cap=vmem_cap)
    else:
        if vmem_limit_bytes is None:
            vmem_limit_bytes = min(resident_budget(tm_eff) + headroom, vmem_cap)

        n_chunks = 2 if (tm_eff >= 256 and tm_eff % (2 * sub) == 0) else 1

        cost = pl.CostEstimate(
            flops=int(4 * n * dim_p * dim_p),
            transcendentals=int(n * dim_p),
            bytes_accessed=int(2 * n * dim_p * xbytes
                               + 2 * dim_p * dim_p * wbytes
                               + 2 * dim_p * bbytes),
        )

        # Ragged last row block is handled by Pallas (masked writeback); no token-dim
        # padding of x.  Safe only because FFN rows are independent.
        out = pl.pallas_call(
            functools.partial(ffn_kernel, n_chunks=n_chunks),
            out_shape=jax.ShapeDtypeStruct((n, dim_p), x.dtype),
            grid_spec=pltpu.PrefetchScalarGridSpec(
                num_scalar_prefetch=0,
                grid=(_cdiv(n, tm_eff),),
                in_specs=[
                    pl.BlockSpec((tm_eff, dim_p), lambda i: (i, 0)),       # x row tile
                    pl.BlockSpec((dim_p, dim_p), lambda i: (0, 0),
                                 pipeline_mode=pl.Buffered(1)),            # W1 (in,out), resident
                    pl.BlockSpec((1, dim_p), lambda i: (0, 0),
                                 pipeline_mode=pl.Buffered(1)),            # b1
                    pl.BlockSpec((dim_p, dim_p), lambda i: (0, 0),
                                 pipeline_mode=pl.Buffered(1)),            # W2 (in,out), resident
                    pl.BlockSpec((1, dim_p), lambda i: (0, 0),
                                 pipeline_mode=pl.Buffered(1)),            # b2
                ],
                out_specs=pl.BlockSpec((tm_eff, dim_p), lambda i: (i, 0)),
            ),
            compiler_params=pltpu.CompilerParams(
                dimension_semantics=("parallel",),
                vmem_limit_bytes=int(vmem_limit_bytes)),
            cost_estimate=cost,
        )(x2, w1t, b1, w2t, b2)

    if dim_p != dim:
        out = out[:, :dim]
    return out.reshape(batch, seq, dim)


def _ref_ffn(x, w1, b1, w2, b2):
    h = jnp.einsum("bsd,od->bso", x, w1) + b1
    h = 0.5 * h * (1.0 + lax.erf(h / math.sqrt(2.0)))
    y = jnp.einsum("bsd,od->bso", h, w2) + b2
    return y


if __name__ == "__main__":
    batch, seq, dim = 2, 8, 32
    key = jax.random.PRNGKey(0)
    kx, k1, k2, k3, k4 = jax.random.split(key, 5)

    x = jax.random.normal(kx, (batch, seq, dim), dtype=jnp.float32)

    # deterministic Linear params, PyTorch layout (out_features, in_features)
    bound = 1.0 / math.sqrt(dim)
    w1 = jax.random.uniform(k1, (dim, dim), jnp.float32, -bound, bound)
    b1 = jax.random.uniform(k2, (dim,), jnp.float32, -bound, bound)
    w2 = jax.random.uniform(k3, (dim, dim), jnp.float32, -bound, bound)
    b2 = jax.random.uniform(k4, (dim,), jnp.float32, -bound, bound)

    params = prepare_ffn_params(w1, b1, w2, b2)   # one-time prep: transpose + pad
    y = transformer_ffn(x, params)
    y = jax.block_until_ready(y)

    y_ref = _ref_ffn(x, w1, b1, w2, b2)
    assert y.shape == (batch, seq, dim)
    assert jnp.allclose(y, y_ref, atol=1e-5, rtol=1e-5), "mismatch vs reference"

    print("KERNEL_OK")
</pallas_src>

<mosaic_0001>
module attributes {stable_mosaic.version = 11 : i64} {
  func.func @ffn_kernel(%arg0: i32, %arg1: memref<8x128xf32, #tpu.memory_space<vmem>>, %arg2: memref<128x128xf32, #tpu.memory_space<vmem>>, %arg3: memref<1x128xf32, #tpu.memory_space<vmem>>, %arg4: memref<128x128xf32, #tpu.memory_space<vmem>>, %arg5: memref<1x128xf32, #tpu.memory_space<vmem>>, %arg6: memref<8x128xf32, #tpu.memory_space<vmem>>) attributes {dimension_semantics = [#tpu.dimension_semantics<parallel>], iteration_bounds = array<i64: 2>, scalar_prefetch = 0 : i64, scratch_operands = 0 : i64, tpu.core_type = #tpu.core_type<tc>, window_params = [{transform_indices = @transform_0, window_bounds = array<i64: 8, 128>}, {pipeline_mode = #tpu.pipeline_mode<synchronous>, transform_indices = @transform_1, window_bounds = array<i64: 128, 128>}, {pipeline_mode = #tpu.pipeline_mode<synchronous>, transform_indices = @transform_2, window_bounds = array<i64: 1, 128>}, {pipeline_mode = #tpu.pipeline_mode<synchronous>, transform_indices = @transform_3, window_bounds = array<i64: 128, 128>}, {pipeline_mode = #tpu.pipeline_mode<synchronous>, transform_indices = @transform_4, window_bounds = array<i64: 1, 128>}, {transform_indices = @transform_5, window_bounds = array<i64: 8, 128>}]} {
    %c0 = arith.constant 0 : index
    %c0_0 = arith.constant 0 : index
    %0 = vector.load %arg2[%c0, %c0_0] : memref<128x128xf32, #tpu.memory_space<vmem>>, vector<128x128xf32>
    %c0_1 = arith.constant 0 : index
    %c0_2 = arith.constant 0 : index
    %1 = vector.load %arg4[%c0_1, %c0_2] : memref<128x128xf32, #tpu.memory_space<vmem>>, vector<128x128xf32>
    %c0_3 = arith.constant 0 : index
    %c0_4 = arith.constant 0 : index
    %2 = vector.load %arg3[%c0_3, %c0_4] : memref<1x128xf32, #tpu.memory_space<vmem>>, vector<1x128xf32>
    %c0_5 = arith.constant 0 : index
    %c0_6 = arith.constant 0 : index
    %3 = vector.load %arg5[%c0_5, %c0_6] : memref<1x128xf32, #tpu.memory_space<vmem>>, vector<1x128xf32>
    %c0_7 = arith.constant 0 : index
    %c0_8 = arith.constant 0 : index
    %4 = vector.load %arg1[%c0_7, %c0_8] : memref<8x128xf32, #tpu.memory_space<vmem>>, vector<8x128xf32>
    %cst = arith.constant dense<0.000000e+00> : vector<8x128xf32>
    %5 = tpu.matmul %4, %0, %cst {dimension_numbers = #tpu.dot_dimension_numbers<[1], [0], [0], [1], [0, 0, 1, 1], [], []>} : vector<8x128xf32>, vector<128x128xf32>, vector<8x128xf32> -> vector<8x128xf32>
    %6 = vector.broadcast %2 : vector<1x128xf32> to vector<8x128xf32>
    %7 = arith.addf %5, %6 : vector<8x128xf32>
    %cst_9 = arith.constant 5.000000e-01 : f32
    %8 = vector.broadcast %cst_9 : f32 to vector<8x128xf32>
    %9 = arith.mulf %8, %7 : vector<8x128xf32>
    %cst_10 = arith.constant 0.707106769 : f32
    %10 = vector.broadcast %cst_10 : f32 to vector<8x128xf32>
    %11 = arith.mulf %7, %10 : vector<8x128xf32>
    %12 = math.erf %11 : vector<8x128xf32>
    %cst_11 = arith.constant 1.000000e+00 : f32
    %13 = vector.broadcast %cst_11 : f32 to vector<8x128xf32>
    %14 = arith.addf %13, %12 : vector<8x128xf32>
    %15 = arith.mulf %9, %14 : vector<8x128xf32>
    %cst_12 = arith.constant dense<0.000000e+00> : vector<8x128xf32>
    %16 = tpu.matmul %15, %1, %cst_12 {dimension_numbers = #tpu.dot_dimension_numbers<[1], [0], [0], [1], [0, 0, 1, 1], [], []>} : vector<8x128xf32>, vector<128x128xf32>, vector<8x128xf32> -> vector<8x128xf32>
    %17 = vector.broadcast %3 : vector<1x128xf32> to vector<8x128xf32>
    %18 = arith.addf %16, %17 : vector<8x128xf32>
    %c0_13 = arith.constant 0 : index
    %c0_14 = arith.constant 0 : index
    %19 = vector.load %arg6[%c0_13, %c0_14] : memref<8x128xf32, #tpu.memory_space<vmem>>, vector<8x128xf32>
    tpu.vector_store %arg6[%c0_13, %c0_14], %18 {strides = array<i32>} : memref<8x128xf32, #tpu.memory_space<vmem>>, vector<8x128xf32>,
    return
  }
  func.func @transform_0(%arg0: i32) -> (i32, i32) {
    %c0_i32 = arith.constant 0 : i32
    %c0_i32_0 = arith.constant 0 : i32
    return %arg0, %c0_i32 : i32, i32
  }
  func.func @transform_1(%arg0: i32) -> (i32, i32) {
    %c0_i32 = arith.constant 0 : i32
    %c0_i32_0 = arith.constant 0 : i32
    %c0_i32_1 = arith.constant 0 : i32
    return %c0_i32, %c0_i32_0 : i32, i32
  }
  func.func @transform_2(%arg0: i32) -> (i32, i32) {
    %c0_i32 = arith.constant 0 : i32
    %c0_i32_0 = arith.constant 0 : i32
    %c0_i32_1 = arith.constant 0 : i32
    return %c0_i32, %c0_i32_0 : i32, i32
  }
  func.func @transform_3(%arg0: i32) -> (i32, i32) {
    %c0_i32 = arith.constant 0 : i32
    %c0_i32_0 = arith.constant 0 : i32
    %c0_i32_1 = arith.constant 0 : i32
    return %c0_i32, %c0_i32_0 : i32, i32
  }
  func.func @transform_4(%arg0: i32) -> (i32, i32) {
    %c0_i32 = arith.constant 0 : i32
    %c0_i32_0 = arith.constant 0 : i32
    %c0_i32_1 = arith.constant 0 : i32
    return %c0_i32, %c0_i32_0 : i32, i32
  }
  func.func @transform_5(%arg0: i32) -> (i32, i32) {
    %c0_i32 = arith.constant 0 : i32
    %c0_i32_0 = arith.constant 0 : i32
    return %arg0, %c0_i32 : i32, i32
  }
}

</mosaic_0001>

<llo_original>
// kernel: tpu_custom_call.1
$region0: #{tpu_custom_call.1}
  #allocation0 [shape = 'u32[]', space=smem, size = 0x4, offset = 0x4, fixed_abs, tag = 'smem constant byte address 0x4 - core index']
  #allocation1 [shape = 'u32[144,128]{1,0:T(1,128)}', space=vmem, size = 0x12000, scoped, tag = 'internal scratch']
  %s0 = inlined_call_operand.hbm [shape: f32[16,128], index: 0, kind: input, shape index: {}]
  %s1 = inlined_call_operand.hbm [shape: f32[128,128], index: 1, kind: input, shape index: {}]
  %s2 = inlined_call_operand.vmem [shape: f32[1,128], index: 2, kind: input, shape index: {}]
  %s3 = inlined_call_operand.hbm [shape: f32[128,128], index: 3, kind: input, shape index: {}]
  %s4 = inlined_call_operand.vmem [shape: f32[1,128], index: 4, kind: input, shape index: {}]
  %s5 = inlined_call_operand.hbm [shape: f32[16,128], index: 5, kind: output, shape index: {}]
  %s6 = sld [smem:[#allocation0]]
  $region65: #{tpu_custom_call.1} parent=0
    _
  %s8 = ssub.s32 1, %s6
  %s9 = scalar_select 0, %s8, %s6
  $region1: #{tpu_custom_call.1} parent=0
    #allocation2 [shape = 'u8[8192]{0}', space=vmem, size = 0x2000, scoped, tag = 'input window, operand 0']
    #allocation3 [shape = 's32[2]{0}', space=sflag, size = 0x8, scoped, tag = 'scoped memory for tpu_custom_call.1']
    #allocation4 [shape = 's32[2]{0}', space=sflag, size = 0x8, scoped, tag = 'scoped memory for tpu_custom_call.1']
    #allocation5 [shape = 'u8[65536]{0}', space=vmem, size = 0x10000, scoped, tag = 'input window, operand 1, single buffered']
    #allocation6 [shape = 's32[1]{0}', space=sflag, size = 0x4, scoped, tag = 'scoped memory for tpu_custom_call.1']
    #allocation7 [shape = 'u8[65536]{0}', space=vmem, size = 0x10000, scoped, tag = 'input window, operand 3, single buffered']
    #allocation8 [shape = 'u8[8192]{0}', space=vmem, size = 0x2000, scoped, tag = 'output window, operand 0']
    %10 = vsyncpa [#allocation3], 0
    %s11 = scalar_lea.sflag [#allocation3], 1
    %12 = vsyncpa %s11, 0
    %13 = vsyncpa [#allocation6], 0
    %14 = vsyncpa [#allocation4], 0
    %s15 = scalar_lea.sflag [#allocation4], 1
    %16 = vsyncpa %s15, 0
    loop: start=0, step=1, limit=4
    $region2: #{tpu_custom_call.1} parent=1 // loop_pre_header
      _
    $region3: #{tpu_custom_call.1} parent=1 // loop_header
      %s18 = sphi 0, %s22
      %p19 = scmp.ge.s32.totalorder %s18, 4
      %s28 = sphi 0, %s30
      %s31 = sphi 0, %s28
      %s32 = sphi 0, %s31
      %s48 = sphi 0, %s32
      %s52 = sphi 0, %s52
      %s54 = sphi 0, %s52
      %s55 = sphi 0, %s54
      %s69 = sphi 0, %s55
      %s73 = sphi 0, %s73
      %s75 = sphi 0, %s73
      %s76 = sphi 0, %s75
      %s90 = sphi 0, %s76
      %s94 = sphi 0, %s94
      %s96 = sphi 0, %s94
      %s97 = sphi 0, %s96
      %s111 = sphi 0, %s97
      %s115 = sphi 0, %s115
      %s117 = sphi 0, %s115
      %s118 = sphi 0, %s117
      %s132 = sphi 0, %s118
      %s138 = sphi 0, %s140
      %s141 = sphi 0, %s138
      %s142 = sphi 0, %s141
      %s158 = sphi 0, %s142
    $region4: #{tpu_custom_call.1} parent=1 // loop_header_branch
      %21 = sbr.rel (%p19) target = $region8
    $region5: #{tpu_custom_call.1} parent=1 // loop_body
      %s23 = ssub.s32 %s18, 1
      %s24 = ssub.s32 %s18, 2
      %s25 = sadd.s32 %s18, 1
      %s26 = ssub.s32 %s18, %s25
      %p27 = scmp.eq.s32.totalorder %s26, 0
      %s29 = sadd.s32 %s28, 1
      %s30 = scalar_select %p27, %s28, %s29
      %p33 = pneg %p27
      %p34 = scmp.eq.s32.totalorder %s18, 1
      %p35 = por %p33, %p34
      %p36 = scmp.ne.s32.totalorder %s28, %s31
      %p37 = scmp.eq.s32.totalorder %s18, 0
      %p38 = por %p36, %p37
      %p39 = scmp.ne.s32.totalorder %s28, %s31
      %p40 = scmp.eq.s32.totalorder %s23, 1
      %p41 = por %p39, %p40
      %p42 = scmp.ne.s32.totalorder %s31, %s32
      %p43 = scmp.eq.s32.totalorder %s23, 0
      %p44 = por %p42, %p43
      %p45 = scmp.ne.s32.totalorder %s31, %s32
      %p46 = scmp.eq.s32.totalorder %s24, 1
      %p47 = por %p45, %p46
      %p49 = scmp.ne.s32.totalorder %s32, %s48
      %p50 = scmp.eq.s32.totalorder %s24, 0
      %p51 = por %p49, %p50
      %s53 = sadd.s32 %s52, 1
      %p56 = scmp.eq.s32.totalorder %s18, 1
      %p57 = scmp.ne.s32.totalorder %s52, %s54
      %p58 = scmp.eq.s32.totalorder %s18, 0
      %p59 = por %p57, %p58
      %p60 = scmp.ne.s32.totalorder %s52, %s54
      %p61 = scmp.eq.s32.totalorder %s23, 1
      %p62 = por %p60, %p61
      %p63 = scmp.ne.s32.totalorder %s54, %s55
      %p64 = scmp.eq.s32.totalorder %s23, 0
      %p65 = por %p63, %p64
      %p66 = scmp.ne.s32.totalorder %s54, %s55
      %p67 = scmp.eq.s32.totalorder %s24, 1
      %p68 = por %p66, %p67
      %p70 = scmp.ne.s32.totalorder %s55, %s69
      %p71 = scmp.eq.s32.totalorder %s24, 0
      %p72 = por %p70, %p71
      %s74 = sadd.s32 %s73, 1
      %p77 = scmp.eq.s32.totalorder %s18, 1
      %p78 = scmp.ne.s32.totalorder %s73, %s75
      %p79 = scmp.eq.s32.totalorder %s18, 0
      %p80 = por %p78, %p79
      %p81 = scmp.ne.s32.totalorder %s73, %s75
      %p82 = scmp.eq.s32.totalorder %s23, 1
      %p83 = por %p81, %p82
      %p84 = scmp.ne.s32.totalorder %s75, %s76
      %p85 = scmp.eq.s32.totalorder %s23, 0
      %p86 = por %p84, %p85
      %p87 = scmp.ne.s32.totalorder %s75, %s76
      %p88 = scmp.eq.s32.totalorder %s24, 1
      %p89 = por %p87, %p88
      %p91 = scmp.ne.s32.totalorder %s76, %s90
      %p92 = scmp.eq.s32.totalorder %s24, 0
      %p93 = por %p91, %p92
      %s95 = sadd.s32 %s94, 1
      %p98 = scmp.eq.s32.totalorder %s18, 1
      %p99 = scmp.ne.s32.totalorder %s94, %s96
      %p100 = scmp.eq.s32.totalorder %s18, 0
      %p101 = por %p99, %p100
      %p102 = scmp.ne.s32.totalorder %s94, %s96
      %p103 = scmp.eq.s32.totalorder %s23, 1
      %p104 = por %p102, %p103
      %p105 = scmp.ne.s32.totalorder %s96, %s97
      %p106 = scmp.eq.s32.totalorder %s23, 0
      %p107 = por %p105, %p106
      %p108 = scmp.ne.s32.totalorder %s96, %s97
      %p109 = scmp.eq.s32.totalorder %s24, 1
      %p110 = por %p108, %p109
      %p112 = scmp.ne.s32.totalorder %s97, %s111
      %p113 = scmp.eq.s32.totalorder %s24, 0
      %p114 = por %p112, %p113
      %s116 = sadd.s32 %s115, 1
      %p119 = scmp.eq.s32.totalorder %s18, 1
      %p120 = scmp.ne.s32.totalorder %s115, %s117
      %p121 = scmp.eq.s32.totalorder %s18, 0
      %p122 = por %p120, %p121
      %p123 = scmp.ne.s32.totalorder %s115, %s117
      %p124 = scmp.eq.s32.totalorder %s23, 1
      %p125 = por %p123, %p124
      %p126 = scmp.ne.s32.totalorder %s117, %s118
      %p127 = scmp.eq.s32.totalorder %s23, 0
      %p128 = por %p126, %p127
      %p129 = scmp.ne.s32.totalorder %s117, %s118
      %p130 = scmp.eq.s32.totalorder %s24, 1
      %p131 = por %p129, %p130
      %p133 = scmp.ne.s32.totalorder %s118, %s132
      %p134 = scmp.eq.s32.totalorder %s24, 0
      %p135 = por %p133, %p134
      %s136 = ssub.s32 %s18, %s25
      %p137 = scmp.eq.s32.totalorder %s136, 0
      %s139 = sadd.s32 %s138, 1
      %s140 = scalar_select %p137, %s138, %s139
      %p143 = pneg %p137
      %p144 = scmp.eq.s32.totalorder %s18, 1
      %p145 = por %p143, %p144
      %p146 = scmp.ne.s32.totalorder %s138, %s141
      %p147 = scmp.eq.s32.totalorder %s18, 0
      %p148 = por %p146, %p147
      %p149 = scmp.ne.s32.totalorder %s138, %s141
      %p150 = scmp.eq.s32.totalorder %s23, 1
      %p151 = por %p149, %p150
      %p152 = scmp.ne.s32.totalorder %s141, %s142
      %p153 = scmp.eq.s32.totalorder %s23, 0
      %p154 = por %p152, %p153
      %p155 = scmp.ne.s32.totalorder %s141, %s142
      %p156 = scmp.eq.s32.totalorder %s24, 1
      %p157 = por %p155, %p156
      %p159 = scmp.ne.s32.totalorder %s142, %s158
      %p160 = scmp.eq.s32.totalorder %s24, 0
      %p161 = por %p159, %p160
      %p162 = scmp.le.s32.totalorder 1, %s18
      %p163 = scmp.lt.s32.totalorder %s18, 3
      %p164 = pnand %p162, %p163
      %p165 = pneg %p164
      // Predicated region
      $region9: #{tpu_custom_call.1} parent=5 // pred_check
        _
      $region10: #{tpu_custom_call.1} parent=5 // pred_check_branch
        %167 = sbr.rel (%p164) target = $region12
      $region11: #{tpu_custom_call.1} parent=5 // pred_region
        %s168 = ssub.s32 %s18, 1
        // Predicated region
        $region13: #{tpu_custom_call.1} parent=11 // pred_check
          %p169 = pneg %p65
        $region14: #{tpu_custom_call.1} parent=11 // pred_check_branch
          %171 = sbr.rel (%p169) target = $region16
        $region15: #{tpu_custom_call.1} parent=11 // pred_region
          %s173 = ssub.s32 2048, 2048
          %174 = vsyncadd [#allocation6], %s173
          %s175 = sshll.u32 [#allocation5], 4
          %s176 = int_to_ptr.vmem [resolvable:$true] %s175
          %181 = dma.hbm_to_vmem [thread:$0]  %s1, 2048, %s176, [#allocation6], 128, 128, 8
        $region16: #{tpu_custom_call.1} parent=11 // pred_fallthru
          _
        // Predicated region
        $region17: #{tpu_custom_call.1} parent=11 // pred_check
          %p182 = pneg %p86
        $region18: #{tpu_custom_call.1} parent=11 // pred_check_branch
          %184 = sbr.rel (%p182) target = $region20
        $region19: #{tpu_custom_call.1} parent=11 // pred_region
          _
        $region20: #{tpu_custom_call.1} parent=11 // pred_fallthru
          _
        // Predicated region
        $region21: #{tpu_custom_call.1} parent=11 // pred_check
          %p185 = pneg %p107
        $region22: #{tpu_custom_call.1} parent=11 // pred_check_branch
          %187 = sbr.rel (%p185) target = $region24
        $region23: #{tpu_custom_call.1} parent=11 // pred_region
          %s189 = ssub.s32 2048, 2048
          %190 = vsyncadd [#allocation6], %s189
          %s191 = sshll.u32 [#allocation7], 4
          %s192 = int_to_ptr.vmem [resolvable:$true] %s191
          %197 = dma.hbm_to_vmem [thread:$0]  %s3, 2048, %s192, [#allocation6], 128, 128, 8
        $region24: #{tpu_custom_call.1} parent=11 // pred_fallthru
          _
        // Predicated region
        $region25: #{tpu_custom_call.1} parent=11 // pred_check
          %p198 = pneg %p128
        $region26: #{tpu_custom_call.1} parent=11 // pred_check_branch
          %200 = sbr.rel (%p198) target = $region28
        $region27: #{tpu_custom_call.1} parent=11 // pred_region
          _
        $region28: #{tpu_custom_call.1} parent=11 // pred_fallthru
          _
      $region12: #{tpu_custom_call.1} parent=5 // pred_fallthru
        _
      %p201 = scmp.lt.s32.totalorder %s18, 2
      // Predicated region
      $region29: #{tpu_custom_call.1} parent=5 // pred_check
        %p202 = pneg %p201
      $region30: #{tpu_custom_call.1} parent=5 // pred_check_branch
        %204 = sbr.rel (%p202) target = $region32
      $region31: #{tpu_custom_call.1} parent=5 // pred_region
        // Predicated region
        $region33: #{tpu_custom_call.1} parent=31 // pred_check
          %p205 = pneg %p38
        $region34: #{tpu_custom_call.1} parent=31 // pred_check_branch
          %207 = sbr.rel (%p205) target = $region36
        $region35: #{tpu_custom_call.1} parent=31 // pred_region
          %s208 = sand.u32 %s28, 1
          %s209 = scalar_lea.sflag [#allocation3], %s208
          %s210 = sand.u32 %s28, 1
          %s211 = smul.addr %s210, 8
          %s212 = scalar_lea.vmem [#allocation2], %s211
          %s214 = ssub.s32 128, 128
          %215 = vsyncadd %s209, %s214
          %s216 = smul.addr %s18, 128
          %s217 = scalar_lea.hbm %s0, %s216
          %s219 = sshll.u32 %s212, 4
          %s220 = int_to_ptr.vmem [resolvable:$true] %s219
          %222 = dma.hbm_to_vmem [thread:$0]  %s217, 128, %s220, %s209
        $region36: #{tpu_custom_call.1} parent=31 // pred_fallthru
          _
      $region32: #{tpu_custom_call.1} parent=5 // pred_fallthru
        _
      %p223 = scmp.le.s32.totalorder 1, %s18
      %p224 = scmp.lt.s32.totalorder %s18, 3
      %p225 = pnand %p223, %p224
      %p226 = pneg %p225
      // Predicated region
      $region37: #{tpu_custom_call.1} parent=5 // pred_check
        _
      $region38: #{tpu_custom_call.1} parent=5 // pred_check_branch
        %228 = sbr.rel (%p225) target = $region40
      $region39: #{tpu_custom_call.1} parent=5 // pred_region
        %s229 = ssub.s32 %s18, 1
        %s230 = sand.u32 %s31, 1
        %s231 = scalar_lea.sflag [#allocation3], %s230
        %s232 = sand.u32 %s31, 1
        %s233 = smul.addr %s232, 8
        %s234 = scalar_lea.vmem [#allocation2], %s233
        // Predicated region
        $region41: #{tpu_custom_call.1} parent=39 // pred_check
          %p235 = pneg %p44
        $region42: #{tpu_custom_call.1} parent=39 // pred_check_branch
          %237 = sbr.rel (%p235) target = $region44
        $region43: #{tpu_custom_call.1} parent=39 // pred_region
          %238 = dma.done %s231, 128
        $region44: #{tpu_custom_call.1} parent=39 // pred_fallthru
          _
        // Predicated region
        $region45: #{tpu_custom_call.1} parent=39 // pred_check
          %p239 = pneg %p65
        $region46: #{tpu_custom_call.1} parent=39 // pred_check_branch
          %241 = sbr.rel (%p239) target = $region48
        $region47: #{tpu_custom_call.1} parent=39 // pred_region
          %242 = dma.done [#allocation6], 2048
        $region48: #{tpu_custom_call.1} parent=39 // pred_fallthru
          _
        // Predicated region
        $region49: #{tpu_custom_call.1} parent=39 // pred_check
          %p243 = pneg %p107
        $region50: #{tpu_custom_call.1} parent=39 // pred_check_branch
          %245 = sbr.rel (%p243) target = $region52
        $region51: #{tpu_custom_call.1} parent=39 // pred_region
          %246 = dma.done [#allocation6], 2048
        $region52: #{tpu_custom_call.1} parent=39 // pred_fallthru
          _
        %s247 = sand.u32 %s31, 1
        %s248 = scalar_lea.sflag [#allocation3], %s247
        %s249 = sand.u32 %s31, 1
        %s250 = smul.addr %s249, 8
        %s251 = scalar_lea.vmem [#allocation2], %s250
        %p252 = pneg %p44
        %p253 = pneg %p41
        %p254 = pneg %p65
        %p255 = pneg %p62
        %p256 = pneg %p86
        %p257 = pneg %p83
        %p258 = pneg %p107
        %p259 = pneg %p104
        %p260 = pneg %p128
        %p261 = pneg %p125
        %p262 = pneg %p154
        %p263 = pneg %p151
        %s264 = sand.u32 %s141, 1
        %s265 = scalar_lea.sflag [#allocation4], %s264
        %s266 = sand.u32 %s141, 1
        %s267 = smul.addr %s266, 8
        %s268 = scalar_lea.vmem [#allocation8], %s267
        %v269 = vld [vmem:[#allocation5] sm:$0xff]
        %v270 = vld [vmem:[#allocation5 + $0x8] sm:$0xff]
        %v271 = vld [vmem:[#allocation5 + $0x10] sm:$0xff]
        %v272 = vld [vmem:[#allocation5 + $0x18] sm:$0xff]
        %v273 = vld [vmem:[#allocation5 + $0x20] sm:$0xff]
        %v274 = vld [vmem:[#allocation5 + $0x28] sm:$0xff]
        %v275 = vld [vmem:[#allocation5 + $0x30] sm:$0xff]
        %v276 = vld [vmem:[#allocation5 + $0x38] sm:$0xff]
        %v277 = vld [vmem:[#allocation5 + $0x40] sm:$0xff]
        %v278 = vld [vmem:[#allocation5 + $0x48] sm:$0xff]
        %v279 = vld [vmem:[#allocation5 + $0x50] sm:$0xff]
        %v280 = vld [vmem:[#allocation5 + $0x58] sm:$0xff]
        %v281 = vld [vmem:[#allocation5 + $0x60] sm:$0xff]
        %v282 = vld [vmem:[#allocation5 + $0x68] sm:$0xff]
        %v283 = vld [vmem:[#allocation5 + $0x70] sm:$0xff]
        %v284 = vld [vmem:[#allocation5 + $0x78] sm:$0xff]
        %v285 = vld [vmem:[#allocation7] sm:$0xff]
        %v286 = vld [vmem:[#allocation7 + $0x8] sm:$0xff]
        %v287 = vld [vmem:[#allocation7 + $0x10] sm:$0xff]
        %v288 = vld [vmem:[#allocation7 + $0x18] sm:$0xff]
        %v289 = vld [vmem:[#allocation7 + $0x20] sm:$0xff]
        %v290 = vld [vmem:[#allocation7 + $0x28] sm:$0xff]
        %v291 = vld [vmem:[#allocation7 + $0x30] sm:$0xff]
        %v292 = vld [vmem:[#allocation7 + $0x38] sm:$0xff]
        %v293 = vld [vmem:[#allocation7 + $0x40] sm:$0xff]
        %v294 = vld [vmem:[#allocation7 + $0x48] sm:$0xff]
        %v295 = vld [vmem:[#allocation7 + $0x50] sm:$0xff]
        %v296 = vld [vmem:[#allocation7 + $0x58] sm:$0xff]
        %v297 = vld [vmem:[#allocation7 + $0x60] sm:$0xff]
        %v298 = vld [vmem:[#allocation7 + $0x68] sm:$0xff]
        %v299 = vld [vmem:[#allocation7 + $0x70] sm:$0xff]
        %v300 = vld [vmem:[#allocation7 + $0x78] sm:$0xff]
        %v301 = vld [vmem:[%s2] sm:$0x1]
        %v302 = vld [vmem:[%s4] sm:$0x1]
        %v303 = vld [vmem:[%s234] sm:$0xff]
        %v305 = vlaneseq
        %v306 = vshrl.u32 %v305, 7
        %v307 = vsub.s32 0, %v306
        %v308 = vrot.slane %v301, %v307
        %310 = vmatprep.subr.mxu0 0.0
        %311 = vmatpush1.msra.mxu0 %v269
        %312 = vmatprep.subr.mxu0 0.0
        %313 = vmatpush1.msra.mxu0 %v270
        %314 = vmatprep.subr.mxu0 0.0
        %315 = vmatpush1.msra.mxu0 %v271
        %316 = vmatprep.subr.mxu0 0.0
        %317 = vmatpush1.msra.mxu0 %v272
        %318 = vmatprep.subr.mxu0 0.0
        %319 = vmatpush1.msra.mxu0 %v273
        %320 = vmatprep.subr.mxu0 0.0
        %321 = vmatpush1.msra.mxu0 %v274
        %322 = vmatprep.subr.mxu0 0.0
        %323 = vmatpush1.msra.mxu0 %v275
        %324 = vmatprep.subr.mxu0 0.0
        %325 = vmatpush1.msra.mxu0 %v276
        %326 = vmatprep.subr.mxu0 0.0
        %327 = vmatpush1.msra.mxu0 %v277
        %328 = vmatprep.subr.mxu0 0.0
        %329 = vmatpush1.msra.mxu0 %v278
        %330 = vmatprep.subr.mxu0 0.0
        %331 = vmatpush1.msra.mxu0 %v279
        %332 = vmatprep.subr.mxu0 0.0
        %333 = vmatpush1.msra.mxu0 %v280
        %334 = vmatprep.subr.mxu0 0.0
        %335 = vmatpush1.msra.mxu0 %v281
        %336 = vmatprep.subr.mxu0 0.0
        %337 = vmatpush1.msra.mxu0 %v282
        %338 = vmatprep.subr.mxu0 0.0
        %339 = vmatpush1.msra.mxu0 %v283
        %340 = vmatprep.subr.mxu0 0.0
        %341 = vmatpush1.msra.mxu0 %v284
        %342 = vmatprep.subr.mxu0 0.0
        %343 = vmatpush1.msra.mxu0 0.0
        %344 = vmatprep.subr.mxu0 0.0
        %345 = vmatpush1.msra.mxu0 0.0
        %346 = vmatprep.subr.mxu0 0.0
        %347 = vmatpush1.msra.mxu0 0.0
        %348 = vmatprep.subr.mxu0 0.0
        %349 = vmatpush1.msra.mxu0 0.0
        %350 = vmatprep.subr.mxu0 0.0
        %351 = vmatpush1.msra.mxu0 0.0
        %352 = vmatprep.subr.mxu0 0.0
        %353 = vmatpush1.msra.mxu0 0.0
        %354 = vmatprep.subr.mxu0 0.0
        %355 = vmatpush1.msra.mxu0 0.0
        %356 = vmatprep.subr.mxu0 0.0
        %357 = vmatpush1.msra.mxu0 0.0
        %358 = vmatprep.subr.mxu0 0.0
        %359 = vmatpush1.msra.mxu0 0.0
        %360 = vmatprep.subr.mxu0 0.0
        %361 = vmatpush1.msra.mxu0 0.0
        %362 = vmatprep.subr.mxu0 0.0
        %363 = vmatpush1.msra.mxu0 0.0
        %364 = vmatprep.subr.mxu0 0.0
        %365 = vmatpush1.msra.mxu0 0.0
        %366 = vmatprep.subr.mxu0 0.0
        %367 = vmatpush1.msra.mxu0 0.0
        %368 = vmatprep.subr.mxu0 0.0
        %369 = vmatpush1.msra.mxu0 0.0
        %370 = vmatprep.subr.mxu0 0.0
        %371 = vmatpush1.msra.mxu0 0.0
        %372 = vmatprep.subr.mxu0 0.0
        %373 = vmatpush1.msra.mxu0 0.0
        %374 = vmatprep.mubr.f32.mxu0 0.0
        %375 = vmatmul.mubr.f32.gmra.mrb[0].mxu0 %v303
        %v376 = vpop.f32.mrb[0].mxu0
        %v377 = vadd.f32 %v308, %v376
        %v378 = vpop.f32.mrb[0].mxu0
        %379 = vdwg.mxu0
        %v380 = vmul.f32 %v377, 0.5
        %v381 = vmul.f32 %v377, 0.70710677
        %v382 = verf.f32.pop %v381
        %v383 = vadd.f32 %v382, 1.0
        %v384 = vmul.f32 %v380, %v383
        %v386 = vlaneseq
        %v387 = vshrl.u32 %v386, 7
        %v388 = vsub.s32 0, %v387
        %v389 = vrot.slane %v302, %v388
        %391 = vmatprep.subr.mxu0 0.0
        %392 = vmatpush1.msra.mxu0 %v285
        %393 = vmatprep.subr.mxu0 0.0
        %394 = vmatpush1.msra.mxu0 %v286
        %395 = vmatprep.subr.mxu0 0.0
        %396 = vmatpush1.msra.mxu0 %v287
        %397 = vmatprep.subr.mxu0 0.0
        %398 = vmatpush1.msra.mxu0 %v288
        %399 = vmatprep.subr.mxu0 0.0
        %400 = vmatpush1.msra.mxu0 %v289
        %401 = vmatprep.subr.mxu0 0.0
        %402 = vmatpush1.msra.mxu0 %v290
        %403 = vmatprep.subr.mxu0 0.0
        %404 = vmatpush1.msra.mxu0 %v291
        %405 = vmatprep.subr.mxu0 0.0
        %406 = vmatpush1.msra.mxu0 %v292
        %407 = vmatprep.subr.mxu0 0.0
        %408 = vmatpush1.msra.mxu0 %v293
        %409 = vmatprep.subr.mxu0 0.0
        %410 = vmatpush1.msra.mxu0 %v294
        %411 = vmatprep.subr.mxu0 0.0
        %412 = vmatpush1.msra.mxu0 %v295
        %413 = vmatprep.subr.mxu0 0.0
        %414 = vmatpush1.msra.mxu0 %v296
        %415 = vmatprep.subr.mxu0 0.0
        %416 = vmatpush1.msra.mxu0 %v297
        %417 = vmatprep.subr.mxu0 0.0
        %418 = vmatpush1.msra.mxu0 %v298
        %419 = vmatprep.subr.mxu0 0.0
        %420 = vmatpush1.msra.mxu0 %v299
        %421 = vmatprep.subr.mxu0 0.0
        %422 = vmatpush1.msra.mxu0 %v300
        %423 = vmatprep.subr.mxu0 0.0
        %424 = vmatpush1.msra.mxu0 0.0
        %425 = vmatprep.subr.mxu0 0.0
        %426 = vmatpush1.msra.mxu0 0.0
        %427 = vmatprep.subr.mxu0 0.0
        %428 = vmatpush1.msra.mxu0 0.0
        %429 = vmatprep.subr.mxu0 0.0
        %430 = vmatpush1.msra.mxu0 0.0
        %431 = vmatprep.subr.mxu0 0.0
        %432 = vmatpush1.msra.mxu0 0.0
        %433 = vmatprep.subr.mxu0 0.0
        %434 = vmatpush1.msra.mxu0 0.0
        %435 = vmatprep.subr.mxu0 0.0
        %436 = vmatpush1.msra.mxu0 0.0
        %437 = vmatprep.subr.mxu0 0.0
        %438 = vmatpush1.msra.mxu0 0.0
        %439 = vmatprep.subr.mxu0 0.0
        %440 = vmatpush1.msra.mxu0 0.0
        %441 = vmatprep.subr.mxu0 0.0
        %442 = vmatpush1.msra.mxu0 0.0
        %443 = vmatprep.subr.mxu0 0.0
        %444 = vmatpush1.msra.mxu0 0.0
        %445 = vmatprep.subr.mxu0 0.0
        %446 = vmatpush1.msra.mxu0 0.0
        %447 = vmatprep.subr.mxu0 0.0
        %448 = vmatpush1.msra.mxu0 0.0
        %449 = vmatprep.subr.mxu0 0.0
        %450 = vmatpush1.msra.mxu0 0.0
        %451 = vmatprep.subr.mxu0 0.0
        %452 = vmatpush1.msra.mxu0 0.0
        %453 = vmatprep.subr.mxu0 0.0
        %454 = vmatpush1.msra.mxu0 0.0
        %455 = vmatprep.mubr.f32.mxu0 0.0
        %456 = vmatmul.mubr.f32.gmra.mrb[0].mxu0 %v384
        %v457 = vpop.f32.mrb[0].mxu0
        %v458 = vadd.f32 %v389, %v457
        %v459 = vpop.f32.mrb[0].mxu0
        %460 = vdwg.mxu0
        %461 = vst [vmem:[%s268] sm:$0xff] %v458
        %s462 = sand.u32 %s141, 1
        %s463 = scalar_lea.sflag [#allocation4], %s462
        %s464 = sand.u32 %s141, 1
        %s465 = smul.addr %s464, 8
        %s466 = scalar_lea.vmem [#allocation8], %s465
        // Predicated region
        $region53: #{tpu_custom_call.1} parent=39 // pred_check
          %p467 = pneg %p151
        $region54: #{tpu_custom_call.1} parent=39 // pred_check_branch
          %469 = sbr.rel (%p467) target = $region56
        $region55: #{tpu_custom_call.1} parent=39 // pred_region
          %s471 = ssub.s32 128, 128
          %472 = vsyncadd %s463, %s471
          %s473 = smul.addr %s23, 128
          %s474 = scalar_lea.hbm %s5, %s473
          %s476 = sshll.u32 %s466, 4
          %s477 = int_to_ptr.vmem [resolvable:$true] %s476
          %479 = dma.vmem_to_hbm [thread:$0]  %s477, 128, %s474, %s463
        $region56: #{tpu_custom_call.1} parent=39 // pred_fallthru
          _
      $region40: #{tpu_custom_call.1} parent=5 // pred_fallthru
        _
      %p480 = scmp.le.s32.totalorder 2, %s18
      // Predicated region
      $region57: #{tpu_custom_call.1} parent=5 // pred_check
        %p481 = pneg %p480
      $region58: #{tpu_custom_call.1} parent=5 // pred_check_branch
        %483 = sbr.rel (%p481) target = $region60
      $region59: #{tpu_custom_call.1} parent=5 // pred_region
        %s484 = ssub.s32 %s18, 2
        // Predicated region
        $region61: #{tpu_custom_call.1} parent=59 // pred_check
          %p485 = pneg %p157
        $region62: #{tpu_custom_call.1} parent=59 // pred_check_branch
          %487 = sbr.rel (%p485) target = $region64
        $region63: #{tpu_custom_call.1} parent=59 // pred_region
          %s488 = sand.u32 %s142, 1
          %s489 = scalar_lea.sflag [#allocation4], %s488
          %s490 = sand.u32 %s142, 1
          %s491 = smul.addr %s490, 8
          %s492 = scalar_lea.vmem [#allocation8], %s491
          %493 = dma.done %s489, 128
        $region64: #{tpu_custom_call.1} parent=59 // pred_fallthru
          _
      $region60: #{tpu_custom_call.1} parent=5 // pred_fallthru
        _
    $region6: #{tpu_custom_call.1} parent=1 // loop_footer
      %s22 = sadd.s32 1, %s18
    $region7: #{tpu_custom_call.1} parent=1 // loop_footer_branch
      %17 = sbr.rel target = $region3
    $region8: #{tpu_custom_call.1} parent=1 // loop_exit
      _
    %494 = vsyncpa [#allocation3], 1
    %s495 = scalar_lea.sflag [#allocation3], 1
    %496 = vsyncpa %s495, 1
    %497 = vsyncpa [#allocation6], 1
    %498 = vsyncpa [#allocation4], 1
    %s499 = scalar_lea.sflag [#allocation4], 1
    %500 = vsyncpa %s499, 1

</llo_original>
